<compile_context>
chip_gen: v7x
topology: tpu7x:2x2x1
jax: 0.10.0
libtpu: 0.0.40
codegen_flags: <defaults>
</compile_context>

<pallas_src>
import functools

import jax
import jax.numpy as jnp
from jax import lax
from jax.experimental import pallas as pl
from jax.experimental.pallas import tpu as pltpu


def _round_up(x, n):
    return (x + n - 1) // n * n


def _vmem_capacity_bytes():
    """Physical VMEM of the current TPU generation (conservative fallback)."""
    try:
        cap = getattr(pltpu.get_tpu_info(), "vmem_capacity_bytes", None)
        if cap:
            return int(cap)
    except Exception:
        pass
    return 64 * 1024 * 1024   # v7x-sized conservative fallback


def _add_margin_kernel(x_ref, w_ref, rx_ref, rw_ref, label_ref, out_ref, *, sm, tc):
    # MXU contraction over the shared D axis (no transpose), f32 accumulation.
    raw = lax.dot_general(
        x_ref[...], w_ref[...],
        dimension_numbers=(((1,), (1,)), ((), ())),
        preferred_element_type=jnp.float32)                        # (tb, tc)

    # cosine * s  ==  raw * rx * (s * rw): two broadcast VPU muls.
    scaled = raw * rx_ref[...] * rw_ref[...]                       # (tb,1), (1,tc) bcast

    # One-hot margin: compare local lane index against (label - j*tc).
    tb = scaled.shape[0]
    local_label = label_ref[...] - pl.program_id(0) * tc           # (tb, 1)
    col = lax.broadcasted_iota(jnp.int32, (tb, tc), 1)
    out = scaled - jnp.where(col == local_label,
                             jnp.float32(sm), jnp.float32(0.0))
    out_ref[...] = out.astype(out_ref.dtype)


def add_margin_product(x, weight, label, *, s=30.0, m=0.4,
                       compute_dtype=jnp.bfloat16, out_dtype=jnp.float32,
                       tb_max=256, tc_max=None):
    """x: (B, in_features), weight: (out_features, in_features), label: (B,) int.

    Returns (B, out_features) in out_dtype.  compute_dtype controls the matmul
    input dtype (bf16 default = MXU-native; jnp.float32 = exact-parity mode)."""
    B, D = x.shape
    C, D2 = weight.shape
    assert D == D2
    eps2 = jnp.float32(1e-24)   # F.normalize eps=1e-12, squared

    # ---- reciprocal norms precomputed once in f32 (hoisted out of the hot loop) ----
    ssx = jnp.sum(jnp.square(x.astype(jnp.float32)), axis=1, keepdims=True)
    rx = lax.rsqrt(jnp.maximum(ssx, eps2))                                   # (B, 1)
    ssw = jnp.sum(jnp.square(weight.astype(jnp.float32)), axis=1)
    rw = (jnp.float32(s) * lax.rsqrt(jnp.maximum(ssw, eps2)))[None, :]       # (1, C), s folded in

    # ---- generation-aware tiling ----
    vmem_cap = _vmem_capacity_bytes()
    c_elt = jnp.dtype(compute_dtype).itemsize
    o_elt = jnp.dtype(out_dtype).itemsize
    pack = max(8, 32 // c_elt)                 # sublane packing: 8 (f32), 16 (bf16)

    tb = min(_round_up(tb_max, pack), _round_up(B, pack))
    if tc_max is None:
        # Bigger class tiles on 128 MiB parts (v5e/v6e) cut x re-reads and
        # per-step overhead; tighter on v7x's 64 MiB VMEM.
        tc_max = 2048 if vmem_cap >= 100 * 1024 * 1024 else 1024
    tc = min(tc_max, _round_up(C, 128))

    def vmem_need(tb_, tc_):
        # double-buffered x / W / out tiles + rx / rw / label tiles
        return 2 * (tb_ * D * c_elt + tc_ * D * c_elt + tb_ * tc_ * o_elt
                    + tb_ * 4 + tc_ * 4 + tb_ * 4)

    budget = int(vmem_cap * 0.55)
    while tc > 128 and vmem_need(tb, tc) > budget:
        tc -= 128
    while tb > pack and vmem_need(tb, tc) > budget:
        tb -= pack

    Bp = _round_up(B, tb)
    Cp = _round_up(C, tc)

    # ---- pad + cast (fused by XLA; pad only when actually needed) ----
    # TODO(synk): for very large C, mask the ragged last class tile in-kernel
    # instead of materializing a padded copy of W.
    xp = x.astype(compute_dtype)
    wp = weight.astype(compute_dtype)
    if Bp != B:
        xp = jnp.pad(xp, ((0, Bp - B), (0, 0)))
        rx = jnp.pad(rx, ((0, Bp - B), (0, 0)))
    if Cp != C:
        wp = jnp.pad(wp, ((0, Cp - C), (0, 0)))
        rw = jnp.pad(rw, ((0, 0), (0, Cp - C)))
    lp = jnp.pad(label.astype(jnp.int32), (0, Bp - B)).reshape(Bp, 1)

    # Explicit VMEM budget with headroom, capped at 3/4 of physical capacity
    # (=48 MiB on v7x) so compiler-internal scratch still fits.
    vmem_limit = int(min(max(vmem_need(tb, tc) * 3 // 2, 16 * 1024 * 1024),
                         vmem_cap * 3 // 4))

    kernel = functools.partial(_add_margin_kernel, sm=float(s) * float(m), tc=tc)

    out = pl.pallas_call(
        kernel,
        out_shape=jax.ShapeDtypeStruct((Bp, Cp), out_dtype),
        grid_spec=pltpu.PrefetchScalarGridSpec(
            num_scalar_prefetch=0,
            # (class tiles, batch tiles): W tile + its norms stay VMEM-resident
            # across the inner batch axis; both axes independent -> both
            # "parallel" so v7x megacore can shard either one.
            grid=(Cp // tc, Bp // tb),
            in_specs=[
                pl.BlockSpec((tb, D), lambda j, i: (i, 0)),    # x
                pl.BlockSpec((tc, D), lambda j, i: (j, 0)),    # W (resident over i)
                pl.BlockSpec((tb, 1), lambda j, i: (i, 0)),    # rx
                pl.BlockSpec((1, tc), lambda j, i: (0, j)),    # s * rw
                pl.BlockSpec((tb, 1), lambda j, i: (i, 0)),    # label
            ],
            out_specs=pl.BlockSpec((tb, tc), lambda j, i: (i, j)),
        ),
        compiler_params=pltpu.CompilerParams(
            dimension_semantics=("parallel", "parallel"),
            vmem_limit_bytes=vmem_limit),
    )(xp, wp, rx, rw, lp)

    return out[:B, :C]


def _xavier_uniform(key, shape):
    # nn.init.xavier_uniform_ for a (fan_out, fan_in) linear weight
    fan_out, fan_in = shape
    bound = jnp.sqrt(6.0 / (fan_in + fan_out))
    return jax.random.uniform(key, shape, jnp.float32, -bound, bound)


def _reference(x, weight, label, s=30.0, m=0.4):
    eps = 1e-12
    xn = x / jnp.maximum(jnp.linalg.norm(x, axis=1, keepdims=True), eps)
    wn = weight / jnp.maximum(jnp.linalg.norm(weight, axis=1, keepdims=True), eps)
    cosine = xn @ wn.T
    phi = cosine - m
    one_hot = jax.nn.one_hot(label, weight.shape[0], dtype=jnp.float32)
    return (one_hot * phi + (1.0 - one_hot) * cosine) * s


if __name__ == "__main__":
    in_features = 32
    out_features = 16
    batch = 8

    key = jax.random.PRNGKey(0)
    kx, kw, kl = jax.random.split(key, 3)

    x = jax.random.normal(kx, (batch, in_features), jnp.float32)
    weight = _xavier_uniform(kw, (out_features, in_features))
    label = jax.random.randint(kl, (batch,), 0, out_features, jnp.int32)

    ref = _reference(x, weight, label)

    # Exact-parity path (f32 MXU inputs).
    out_f32 = jax.block_until_ready(
        add_margin_product(x, weight, label, s=30.0, m=0.4,
                           compute_dtype=jnp.float32))
    assert out_f32.shape == (batch, out_features)
    assert jnp.allclose(out_f32, ref, atol=1e-4, rtol=1e-4), (
        f"f32 path max abs err {jnp.max(jnp.abs(out_f32 - ref))}")

    # Default fast path (bf16 MXU inputs, f32 accumulation / norms).
    out_bf16 = jax.block_until_ready(
        add_margin_product(x, weight, label, s=30.0, m=0.4))
    assert out_bf16.shape == (batch, out_features)
    assert jnp.allclose(out_bf16, ref, atol=2e-1, rtol=2e-2), (
        f"bf16 path max abs err {jnp.max(jnp.abs(out_bf16 - ref))}")

    print("KERNEL_OK")
</pallas_src>

<mosaic_0001>
module attributes {stable_mosaic.version = 11 : i64} {
  func.func @_add_margin_kernel(%arg0: i32, %arg1: i32, %arg2: memref<8x32xf32, #tpu.memory_space<vmem>>, %arg3: memref<128x32xf32, #tpu.memory_space<vmem>>, %arg4: memref<8x1xf32, #tpu.memory_space<vmem>>, %arg5: memref<1x128xf32, #tpu.memory_space<vmem>>, %arg6: memref<8x1xi32, #tpu.memory_space<vmem>>, %arg7: memref<8x128xf32, #tpu.memory_space<vmem>>) attributes {dimension_semantics = [#tpu.dimension_semantics<parallel>, #tpu.dimension_semantics<parallel>], iteration_bounds = array<i64: 1, 1>, scalar_prefetch = 0 : i64, scratch_operands = 0 : i64, tpu.core_type = #tpu.core_type<tc>, window_params = [{transform_indices = @transform_0, window_bounds = array<i64: 8, 32>}, {transform_indices = @transform_1, window_bounds = array<i64: 128, 32>}, {transform_indices = @transform_2, window_bounds = array<i64: 8, 1>}, {transform_indices = @transform_3, window_bounds = array<i64: 1, 128>}, {transform_indices = @transform_4, window_bounds = array<i64: 8, 1>}, {transform_indices = @transform_5, window_bounds = array<i64: 8, 128>}]} {
    %c0 = arith.constant 0 : index
    %c0_0 = arith.constant 0 : index
    %0 = vector.load %arg2[%c0, %c0_0] : memref<8x32xf32, #tpu.memory_space<vmem>>, vector<8x32xf32>
    %c0_1 = arith.constant 0 : index
    %c0_2 = arith.constant 0 : index
    %1 = vector.load %arg3[%c0_1, %c0_2] : memref<128x32xf32, #tpu.memory_space<vmem>>, vector<128x32xf32>
    %cst = arith.constant dense<0.000000e+00> : vector<8x128xf32>
    %2 = tpu.matmul %0, %1, %cst {dimension_numbers = #tpu.dot_dimension_numbers<[1], [1], [0], [0], [0, 0, 1, 0], [], []>} : vector<8x32xf32>, vector<128x32xf32>, vector<8x128xf32> -> vector<8x128xf32>
    %c0_3 = arith.constant 0 : index
    %c0_4 = arith.constant 0 : index
    %3 = vector.load %arg4[%c0_3, %c0_4] : memref<8x1xf32, #tpu.memory_space<vmem>>, vector<8x1xf32>
    %4 = vector.broadcast %3 : vector<8x1xf32> to vector<8x128xf32>
    %5 = arith.mulf %2, %4 : vector<8x128xf32>
    %c0_5 = arith.constant 0 : index
    %c0_6 = arith.constant 0 : index
    %6 = vector.load %arg5[%c0_5, %c0_6] : memref<1x128xf32, #tpu.memory_space<vmem>>, vector<1x128xf32>
    %7 = vector.broadcast %6 : vector<1x128xf32> to vector<8x128xf32>
    %8 = arith.mulf %5, %7 : vector<8x128xf32>
    %c0_7 = arith.constant 0 : index
    %c0_8 = arith.constant 0 : index
    %9 = vector.load %arg6[%c0_7, %c0_8] : memref<8x1xi32, #tpu.memory_space<vmem>>, vector<8x1xi32>
    %c128_i32 = arith.constant 128 : i32
    %10 = arith.muli %arg0, %c128_i32 : i32
    %11 = vector.broadcast %10 : i32 to vector<8x1xi32>
    %12 = arith.subi %9, %11 : vector<8x1xi32>
    %13 = tpu.iota {dimensions = array<i32: 1>} : vector<8x128xi32>
    %14 = vector.broadcast %12 : vector<8x1xi32> to vector<8x128xi32>
    %15 = arith.cmpi eq, %13, %14 : vector<8x128xi32>
    %cst_9 = arith.constant 1.200000e+01 : f32
    %cst_10 = arith.constant 0.000000e+00 : f32
    %16 = vector.broadcast %cst_9 : f32 to vector<8x128xf32>
    %17 = vector.broadcast %cst_10 : f32 to vector<8x128xf32>
    %18 = arith.select %15, %16, %17 : vector<8x128xi1>, vector<8x128xf32>
    %19 = arith.subf %8, %18 : vector<8x128xf32>
    %c0_11 = arith.constant 0 : index
    %c0_12 = arith.constant 0 : index
    %20 = vector.load %arg7[%c0_11, %c0_12] : memref<8x128xf32, #tpu.memory_space<vmem>>, vector<8x128xf32>
    tpu.vector_store %arg7[%c0_11, %c0_12], %19 {strides = array<i32>} : memref<8x128xf32, #tpu.memory_space<vmem>>, vector<8x128xf32>,
    return
  }
  func.func @transform_0(%arg0: i32, %arg1: i32) -> (i32, i32) {
    %c0_i32 = arith.constant 0 : i32
    %c0_i32_0 = arith.constant 0 : i32
    return %arg1, %c0_i32 : i32, i32
  }
  func.func @transform_1(%arg0: i32, %arg1: i32) -> (i32, i32) {
    %c0_i32 = arith.constant 0 : i32
    %c0_i32_0 = arith.constant 0 : i32
    return %arg0, %c0_i32 : i32, i32
  }
  func.func @transform_2(%arg0: i32, %arg1: i32) -> (i32, i32) {
    %c0_i32 = arith.constant 0 : i32
    %c0_i32_0 = arith.constant 0 : i32
    return %arg1, %c0_i32 : i32, i32
  }
  func.func @transform_3(%arg0: i32, %arg1: i32) -> (i32, i32) {
    %c0_i32 = arith.constant 0 : i32
    %c0_i32_0 = arith.constant 0 : i32
    return %c0_i32, %arg0 : i32, i32
  }
  func.func @transform_4(%arg0: i32, %arg1: i32) -> (i32, i32) {
    %c0_i32 = arith.constant 0 : i32
    %c0_i32_0 = arith.constant 0 : i32
    return %arg1, %c0_i32 : i32, i32
  }
  func.func @transform_5(%arg0: i32, %arg1: i32) -> (i32, i32) {
    %c0_i32 = arith.constant 0 : i32
    return %arg1, %arg0 : i32, i32
  }
}

</mosaic_0001>

<llo_original>
// kernel: tpu_custom_call.1
$region0: #{tpu_custom_call.1}
  #allocation0 [shape = 'u32[]', space=smem, size = 0x4, offset = 0x4, fixed_abs, tag = 'smem constant byte address 0x4 - core index']
  #allocation1 [shape = 'u32[144,128]{1,0:T(1,128)}', space=vmem, size = 0x12000, scoped, tag = 'internal scratch']
  %s0 = inlined_call_operand.vmem [shape: f32[8,32], index: 0, kind: input, shape index: {}]
  %s1 = inlined_call_operand.vmem [shape: f32[128,32], index: 1, kind: input, shape index: {}]
  %s2 = inlined_call_operand.vmem [shape: f32[8,1], index: 2, kind: input, shape index: {}]
  %s3 = inlined_call_operand.vmem [shape: f32[1,128], index: 3, kind: input, shape index: {}]
  %s4 = inlined_call_operand.vmem [shape: s32[8,1], index: 4, kind: input, shape index: {}]
  %s5 = inlined_call_operand.hbm [shape: f32[8,128], index: 5, kind: output, shape index: {}]
  %s6 = sld [smem:[#allocation0]]
  $region30: #{tpu_custom_call.1} parent=0
    _
  %s8 = ssub.s32 1, %s6
  %s9 = scalar_select 0, %s8, %s6
  $region1: #{tpu_custom_call.1} parent=0
    #allocation2 [shape = 'u8[4096]{0}', space=vmem, size = 0x1000, scoped, tag = 'output window, operand 0, single buffered']
    #allocation3 [shape = 's32[1]{0}', space=sflag, size = 0x4, scoped, tag = 'scoped memory for tpu_custom_call.1']
    %10 = vsyncpa [#allocation3], 0
    // Predicated region
    $region2: #{tpu_custom_call.1} parent=1 // pred_check
      _
    $region3: #{tpu_custom_call.1} parent=1 // pred_check_branch
      %12 = sbr.rel (0) target = $region5
    $region4: #{tpu_custom_call.1} parent=1 // pred_region
      _
    $region5: #{tpu_custom_call.1} parent=1 // pred_fallthru
      _
    // Predicated region
    $region6: #{tpu_custom_call.1} parent=1 // pred_check
      _
    $region7: #{tpu_custom_call.1} parent=1 // pred_check_branch
      %14 = sbr.rel (0) target = $region9
    $region8: #{tpu_custom_call.1} parent=1 // pred_region
      _
    $region9: #{tpu_custom_call.1} parent=1 // pred_fallthru
      _
    // Predicated region
    $region10: #{tpu_custom_call.1} parent=1 // pred_check
      _
    $region11: #{tpu_custom_call.1} parent=1 // pred_check_branch
      %16 = sbr.rel (0) target = $region13
    $region12: #{tpu_custom_call.1} parent=1 // pred_region
      _
    $region13: #{tpu_custom_call.1} parent=1 // pred_fallthru
      _
    // Predicated region
    $region14: #{tpu_custom_call.1} parent=1 // pred_check
      _
    $region15: #{tpu_custom_call.1} parent=1 // pred_check_branch
      %18 = sbr.rel (0) target = $region17
    $region16: #{tpu_custom_call.1} parent=1 // pred_region
      _
    $region17: #{tpu_custom_call.1} parent=1 // pred_fallthru
      _
    // Predicated region
    $region18: #{tpu_custom_call.1} parent=1 // pred_check
      _
    $region19: #{tpu_custom_call.1} parent=1 // pred_check_branch
      %20 = sbr.rel (0) target = $region21
    $region20: #{tpu_custom_call.1} parent=1 // pred_region
      _
    $region21: #{tpu_custom_call.1} parent=1 // pred_fallthru
      _
    %v21 = vld [vmem:[%s0] sm:$0xff]
    %v22 = vld [vmem:[%s1] sm:$0xff]
    %v23 = vld [vmem:[%s1 + $0x8] sm:$0xff]
    %v24 = vld [vmem:[%s1 + $0x10] sm:$0xff]
    %v25 = vld [vmem:[%s1 + $0x18] sm:$0xff]
    %v26 = vld [vmem:[%s1 + $0x20] sm:$0xff]
    %v27 = vld [vmem:[%s1 + $0x28] sm:$0xff]
    %v28 = vld [vmem:[%s1 + $0x30] sm:$0xff]
    %v29 = vld [vmem:[%s1 + $0x38] sm:$0xff]
    %v30 = vld [vmem:[%s1 + $0x40] sm:$0xff]
    %v31 = vld [vmem:[%s1 + $0x48] sm:$0xff]
    %v32 = vld [vmem:[%s1 + $0x50] sm:$0xff]
    %v33 = vld [vmem:[%s1 + $0x58] sm:$0xff]
    %v34 = vld [vmem:[%s1 + $0x60] sm:$0xff]
    %v35 = vld [vmem:[%s1 + $0x68] sm:$0xff]
    %v36 = vld [vmem:[%s1 + $0x70] sm:$0xff]
    %v37 = vld [vmem:[%s1 + $0x78] sm:$0xff]
    %vm38 = vcmask 261120
    %v40 = vsel %vm38, %v21, 0
    %v43 = vsel %vm38, %v22, 0
    %v46 = vsel %vm38, %v23, 0
    %v49 = vsel %vm38, %v24, 0
    %v52 = vsel %vm38, %v25, 0
    %v55 = vsel %vm38, %v26, 0
    %v58 = vsel %vm38, %v27, 0
    %v61 = vsel %vm38, %v28, 0
    %v64 = vsel %vm38, %v29, 0
    %v67 = vsel %vm38, %v30, 0
    %v70 = vsel %vm38, %v31, 0
    %v73 = vsel %vm38, %v32, 0
    %v76 = vsel %vm38, %v33, 0
    %v79 = vsel %vm38, %v34, 0
    %v82 = vsel %vm38, %v35, 0
    %v85 = vsel %vm38, %v36, 0
    %v88 = vsel %vm38, %v37, 0
    %90 = vmatprep.subr.mxu0 0.0
    %91 = vmatpush1.xpose.msra.mxu0 %v43
    %92 = vmatprep.subr.mxu0 0.0
    %93 = vmatpush1.xpose.msra.mxu0 %v46
    %94 = vmatprep.subr.mxu0 0.0
    %95 = vmatpush1.xpose.msra.mxu0 %v49
    %96 = vmatprep.subr.mxu0 0.0
    %97 = vmatpush1.xpose.msra.mxu0 %v52
    %98 = vmatprep.subr.mxu0 0.0
    %99 = vmatpush1.xpose.msra.mxu0 %v55
    %100 = vmatprep.subr.mxu0 0.0
    %101 = vmatpush1.xpose.msra.mxu0 %v58
    %102 = vmatprep.subr.mxu0 0.0
    %103 = vmatpush1.xpose.msra.mxu0 %v61
    %104 = vmatprep.subr.mxu0 0.0
    %105 = vmatpush1.xpose.msra.mxu0 %v64
    %106 = vmatprep.subr.mxu0 0.0
    %107 = vmatpush1.xpose.msra.mxu0 %v67
    %108 = vmatprep.subr.mxu0 0.0
    %109 = vmatpush1.xpose.msra.mxu0 %v70
    %110 = vmatprep.subr.mxu0 0.0
    %111 = vmatpush1.xpose.msra.mxu0 %v73
    %112 = vmatprep.subr.mxu0 0.0
    %113 = vmatpush1.xpose.msra.mxu0 %v76
    %114 = vmatprep.subr.mxu0 0.0
    %115 = vmatpush1.xpose.msra.mxu0 %v79
    %116 = vmatprep.subr.mxu0 0.0
    %117 = vmatpush1.xpose.msra.mxu0 %v82
    %118 = vmatprep.subr.mxu0 0.0
    %119 = vmatpush1.xpose.msra.mxu0 %v85
    %120 = vmatprep.subr.mxu0 0.0
    %121 = vmatpush1.xpose.msra.mxu0 %v88
    %122 = vmatprep.subr.mxu0 0.0
    %123 = vmatpush1.xpose.msra.mxu0 0.0
    %124 = vmatprep.subr.mxu0 0.0
    %125 = vmatpush1.xpose.msra.mxu0 0.0
    %126 = vmatprep.subr.mxu0 0.0
    %127 = vmatpush1.xpose.msra.mxu0 0.0
    %128 = vmatprep.subr.mxu0 0.0
    %129 = vmatpush1.xpose.msra.mxu0 0.0
    %130 = vmatprep.subr.mxu0 0.0
    %131 = vmatpush1.xpose.msra.mxu0 0.0
    %132 = vmatprep.subr.mxu0 0.0
    %133 = vmatpush1.xpose.msra.mxu0 0.0
    %134 = vmatprep.subr.mxu0 0.0
    %135 = vmatpush1.xpose.msra.mxu0 0.0
    %136 = vmatprep.subr.mxu0 0.0
    %137 = vmatpush1.xpose.msra.mxu0 0.0
    %138 = vmatprep.subr.mxu0 0.0
    %139 = vmatpush1.xpose.msra.mxu0 0.0
    %140 = vmatprep.subr.mxu0 0.0
    %141 = vmatpush1.xpose.msra.mxu0 0.0
    %142 = vmatprep.subr.mxu0 0.0
    %143 = vmatpush1.xpose.msra.mxu0 0.0
    %144 = vmatprep.subr.mxu0 0.0
    %145 = vmatpush1.xpose.msra.mxu0 0.0
    %146 = vmatprep.subr.mxu0 0.0
    %147 = vmatpush1.xpose.msra.mxu0 0.0
    %148 = vmatprep.subr.mxu0 0.0
    %149 = vmatpush1.xpose.msra.mxu0 0.0
    %150 = vmatprep.subr.mxu0 0.0
    %151 = vmatpush1.xpose.msra.mxu0 0.0
    %152 = vmatprep.subr.mxu0 0.0
    %153 = vmatpush1.xpose.msra.mxu0 0.0
    %154 = vmatprep.mubr.f32.mxu0 0.0
    %155 = vmatmul.mubr.f32.gmra.mrb[0].mxu0 %v40
    %v156 = vpop.f32.mrb[0].mxu0
    %v157 = vadd.f32 0.0, %v156
    %v158 = vpop.f32.mrb[0].mxu0
    %159 = vdwg.mxu0
    %v160 = vld [vmem:[%s2] sm:$0xff]
    %162 = vset.pattern.permute.xlu0 0
    %163 = vperm.xlu0 %162, %v160
    %v164 = vpop.permute.xlu0 %163
    %v166 = vmul.f32 %v157, %v164
    %v167 = vld [vmem:[%s3] sm:$0x1]
    %v169 = vlaneseq
    %v170 = vshrl.u32 %v169, 7
    %v171 = vsub.s32 0, %v170
    %v172 = vrot.slane %v167, %v171
    %v174 = vmul.f32 %v166, %v172
    %v175 = vld [vmem:[%s4] sm:$0xff]
    %s176 = smul.u32 0, 128
    %v177 = vstv %s176
    %v178 = vsub.s32 %v175, %v177
    %v179 = vlaneseq
    %v180 = vand.u32 %v179, 127
    %181 = vset.pattern.permute.xlu0 0
    %182 = vperm.xlu0 %181, %v178
    %v183 = vpop.permute.xlu0 %182
    %vm184 = vcmp.eq.s32.totalorder %v180, %v183
    %v185 = vsel %vm184, 12.0, 0.0
    %v186 = vsub.f32 %v174, %v185
    %187 = vst [vmem:[#allocation2] sm:$0xff] %v186
    // Predicated region
    $region22: #{tpu_custom_call.1} parent=1 // pred_check
      _
    $region23: #{tpu_custom_call.1} parent=1 // pred_check_branch
      %189 = sbr.rel (0) target = $region25
    $region24: #{tpu_custom_call.1} parent=1 // pred_region
      %s191 = ssub.s32 128, 128
      %192 = vsyncadd [#allocation3], %s191
      %s194 = sshll.u32 [#allocation2], 4
      %s195 = int_to_ptr.vmem [resolvable:$true] %s194
      %197 = dma.vmem_to_hbm [thread:$0]  %s195, 128, %s5, [#allocation3]
    $region25: #{tpu_custom_call.1} parent=1 // pred_fallthru
      _
    // Predicated region
    $region26: #{tpu_custom_call.1} parent=1 // pred_check
      _
    $region27: #{tpu_custom_call.1} parent=1 // pred_check_branch
      %199 = sbr.rel (0) target = $region29
    $region28: #{tpu_custom_call.1} parent=1 // pred_region
      %200 = dma.done [#allocation3], 128
    $region29: #{tpu_custom_call.1} parent=1 // pred_fallthru
      _
    %201 = vsyncpa [#allocation3], 1

</llo_original>
